<compile_context>
chip_gen: v7x
topology: tpu7x:2x2x1
jax: 0.10.0
libtpu: 0.0.40
codegen_flags: <defaults>
</compile_context>

<pallas_src>
import functools
import math

import jax
import jax.numpy as jnp
from jax.experimental import pallas as pl
from jax.experimental.pallas import tpu as pltpu


def _rope_cache_kernel(pat_ref, cos_ref, sin_ref, *, fold):
    # pat_ref: (2, lanes) f32 -- row 0: lane -> position offset (lane // dim),
    #                            row 1: lane -> inv_freq[lane % dim]
    # cos_ref/sin_ref: (tile_rows, lanes) f32
    tile_rows, lanes = cos_ref.shape
    row = jax.lax.broadcasted_iota(jnp.int32, (tile_rows, lanes), 0)
    # global position of the first packed element of each lane-row
    pos_base = (pl.program_id(0) * tile_rows + row) * fold        # int32
    pos = pos_base.astype(jnp.float32) + pat_ref[0:1, :]          # + lane offset
    freqs = pos * pat_ref[1:2, :]                                 # * inv_freq
    cos_ref[...] = jnp.cos(freqs)
    sin_ref[...] = jnp.sin(freqs)


@functools.partial(
    jax.jit,
    static_argnames=("seq_len", "dim", "fold", "lanes", "tile_rows", "n_tiles"),
)
def _build_rope_cache(inv_freq, *, seq_len, dim, fold, lanes, tile_rows, n_tiles):
    n_rows_pad = n_tiles * tile_rows

    # Per-lane pattern: lane -> position offset (lane // dim) and inv_freq[lane % dim].
    off = (jnp.arange(lanes, dtype=jnp.int32) // dim).astype(jnp.float32)
    inv = jnp.tile(inv_freq.astype(jnp.float32), (fold,))
    pat = jnp.stack([off, inv], axis=0)                           # (2, lanes)

    kernel = functools.partial(_rope_cache_kernel, fold=fold)
    cos_p, sin_p = pl.pallas_call(
        kernel,
        out_shape=(
            jax.ShapeDtypeStruct((n_rows_pad, lanes), jnp.float32),
            jax.ShapeDtypeStruct((n_rows_pad, lanes), jnp.float32),
        ),
        grid=(n_tiles,),
        in_specs=[pl.BlockSpec((2, lanes), lambda i: (0, 0))],
        out_specs=(
            pl.BlockSpec((tile_rows, lanes), lambda i: (i, 0)),
            pl.BlockSpec((tile_rows, lanes), lambda i: (i, 0)),
        ),
        compiler_params=pltpu.CompilerParams(
            dimension_semantics=("parallel",),
            vmem_limit_bytes=32 * 1024 * 1024,
        ),
    )(pat)

    # Packed rows are consecutive positions in row-major order -> plain reshape.
    cos = cos_p.reshape(-1, dim)[:seq_len].reshape(seq_len, 1, 1, dim)
    sin = sin_p.reshape(-1, dim)[:seq_len].reshape(seq_len, 1, 1, dim)
    return cos, sin


class RotaryPositionalEmbedding:
    """JAX/Pallas port of the given RotaryPositionalEmbedding module."""

    def __init__(self, dim, base=10000, precision=jnp.float16):
        self.dim = dim
        self.base = base
        self.precision = precision  # parity only; forward returns f32 like torch
        # inv_freq = 1 / base ** (arange(0, dim) / dim)  -- matches the given spec
        self.inv_freq = 1.0 / (
            base ** (jnp.arange(0, dim, dtype=jnp.float32) / dim)
        )
        self.seq_len_cached = 0
        self.cos_cached = jnp.empty((0, 1, 1, dim), dtype=jnp.float32)
        self.sin_cached = jnp.empty((0, 1, 1, dim), dtype=jnp.float32)

    def _tiling(self, seq_len):
        dim = self.dim
        LANE = 128
        if dim % LANE == 0:
            fold, lanes = 1, dim                       # already lane-dense
        else:
            l = math.lcm(dim, LANE)
            if l <= 2048:
                fold, lanes = l // dim, l              # pack `fold` positions per row
            else:
                fold, lanes = 1, dim                   # rare fallback (masked stores)

        # rows of the packed (rows, lanes) layout; pad to sublane multiple of 8
        n_rows = -(-seq_len // fold)
        n_rows = -(-n_rows // 8) * 8

        # ~4 MiB per output tile => 8 MiB/step combined, 16 MiB double-buffered
        tile_bytes = 4 * 1024 * 1024
        max_tile_rows = max(8, (tile_bytes // (lanes * 4)) // 8 * 8)
        tile_rows = min(n_rows, max_tile_rows)

        # v7x: ensure >= 2 tiles when possible so both TensorCores get work
        if n_rows > 8:
            half = -(-(-(-seq_len // fold) // 2) // 8) * 8   # ceil(ceil(S/fold)/2) to 8
            half = min(half, n_rows)
            tile_rows = min(tile_rows, max(8, half))

        n_tiles = -(-n_rows // tile_rows)
        return fold, lanes, tile_rows, n_tiles

    def _build_cache(self, seq_len):
        fold, lanes, tile_rows, n_tiles = self._tiling(seq_len)
        return _build_rope_cache(
            self.inv_freq,
            seq_len=seq_len,
            dim=self.dim,
            fold=fold,
            lanes=lanes,
            tile_rows=tile_rows,
            n_tiles=n_tiles,
        )

    def forward(self, x, seq_len: int = 0):
        # x: T x B x C (unused numerically; only supplies device/dtype in torch)
        # TODO(synk): host-side seq_len cache is Python state; under an outer jit
        # it will not update like the torch module and each new seq_len retraces.
        if seq_len > self.seq_len_cached:
            self.seq_len_cached = seq_len
            self.cos_cached, self.sin_cached = self._build_cache(seq_len)
        return self.cos_cached, self.sin_cached

    __call__ = forward


if __name__ == "__main__":
    T, B, C = 8, 2, 32  # seq=8, batch=2, hidden=32
    dim = C

    key = jax.random.PRNGKey(0)
    x = jax.random.normal(key, (T, B, C), dtype=jnp.float32)

    rope = RotaryPositionalEmbedding(dim)
    cos, sin = rope(x, seq_len=T)
    cos = jax.block_until_ready(cos)
    sin = jax.block_until_ready(sin)

    # Reference check in plain JAX (same math as the given PyTorch module).
    t = jnp.arange(T, dtype=jnp.float32)
    inv_freq = 1.0 / (10000 ** (jnp.arange(0, dim, dtype=jnp.float32) / dim))
    freqs = jnp.einsum("i,j->ij", t, inv_freq)
    cos_ref = jnp.cos(freqs).reshape(T, 1, 1, dim)
    sin_ref = jnp.sin(freqs).reshape(T, 1, 1, dim)

    assert cos.shape == (T, 1, 1, dim) and sin.shape == (T, 1, 1, dim)
    assert jnp.allclose(cos, cos_ref, atol=1e-5, rtol=1e-5)
    assert jnp.allclose(sin, sin_ref, atol=1e-5, rtol=1e-5)

    print("KERNEL_OK")
</pallas_src>

<mosaic_0001>
module attributes {stable_mosaic.version = 11 : i64} {
  func.func @_rope_cache_kernel(%arg0: i32, %arg1: memref<2x128xf32, #tpu.memory_space<vmem>>, %arg2: memref<8x128xf32, #tpu.memory_space<vmem>>, %arg3: memref<8x128xf32, #tpu.memory_space<vmem>>) attributes {dimension_semantics = [#tpu.dimension_semantics<parallel>], iteration_bounds = array<i64: 1>, scalar_prefetch = 0 : i64, scratch_operands = 0 : i64, tpu.core_type = #tpu.core_type<tc>, window_params = [{pipeline_mode = #tpu.pipeline_mode<synchronous>, transform_indices = @transform_0, window_bounds = array<i64: 2, 128>}, {transform_indices = @transform_1, window_bounds = array<i64: 8, 128>}, {transform_indices = @transform_2, window_bounds = array<i64: 8, 128>}]} {
    %0 = tpu.iota {dimensions = array<i32: 0>} : vector<8x128xi32>
    %c8_i32 = arith.constant 8 : i32
    %1 = arith.muli %arg0, %c8_i32 : i32
    %2 = vector.broadcast %1 : i32 to vector<8x128xi32>
    %3 = arith.addi %2, %0 : vector<8x128xi32>
    %c4_i32 = arith.constant 4 : i32
    %4 = vector.broadcast %c4_i32 : i32 to vector<8x128xi32>
    %5 = arith.muli %3, %4 : vector<8x128xi32>
    %6 = arith.sitofp %5 : vector<8x128xi32> to vector<8x128xf32>
    %c0 = arith.constant 0 : index
    %c0_0 = arith.constant 0 : index
    %7 = vector.load %arg1[%c0, %c0_0] : memref<2x128xf32, #tpu.memory_space<vmem>>, vector<1x128xf32>
    %8 = vector.broadcast %7 : vector<1x128xf32> to vector<8x128xf32>
    %9 = arith.addf %6, %8 : vector<8x128xf32>
    %c1 = arith.constant 1 : index
    %c0_1 = arith.constant 0 : index
    %10 = vector.load %arg1[%c1, %c0_1] : memref<2x128xf32, #tpu.memory_space<vmem>>, vector<1x128xf32>
    %11 = vector.broadcast %10 : vector<1x128xf32> to vector<8x128xf32>
    %12 = arith.mulf %9, %11 : vector<8x128xf32>
    %13 = math.cos %12 : vector<8x128xf32>
    %c0_2 = arith.constant 0 : index
    %c0_3 = arith.constant 0 : index
    %14 = vector.load %arg2[%c0_2, %c0_3] : memref<8x128xf32, #tpu.memory_space<vmem>>, vector<8x128xf32>
    tpu.vector_store %arg2[%c0_2, %c0_3], %13 {strides = array<i32>} : memref<8x128xf32, #tpu.memory_space<vmem>>, vector<8x128xf32>,
    %15 = math.sin %12 : vector<8x128xf32>
    %c0_4 = arith.constant 0 : index
    %c0_5 = arith.constant 0 : index
    %16 = vector.load %arg3[%c0_4, %c0_5] : memref<8x128xf32, #tpu.memory_space<vmem>>, vector<8x128xf32>
    tpu.vector_store %arg3[%c0_4, %c0_5], %15 {strides = array<i32>} : memref<8x128xf32, #tpu.memory_space<vmem>>, vector<8x128xf32>,
    return
  }
  func.func @transform_0(%arg0: i32) -> (i32, i32) {
    %c0_i32 = arith.constant 0 : i32
    %c0_i32_0 = arith.constant 0 : i32
    %c0_i32_1 = arith.constant 0 : i32
    return %c0_i32, %c0_i32_0 : i32, i32
  }
  func.func @transform_1(%arg0: i32) -> (i32, i32) {
    %c0_i32 = arith.constant 0 : i32
    %c0_i32_0 = arith.constant 0 : i32
    return %arg0, %c0_i32 : i32, i32
  }
  func.func @transform_2(%arg0: i32) -> (i32, i32) {
    %c0_i32 = arith.constant 0 : i32
    %c0_i32_0 = arith.constant 0 : i32
    return %arg0, %c0_i32 : i32, i32
  }
}

</mosaic_0001>

<llo_original>
// kernel: tile.8
$region0: #{tile.8}
  #allocation0 [shape = 's32[1]{0}', space=sflag, size = 0x4, scoped, tag = 'scoped memory for tile.8']
  %s0 = inlined_call_operand.vmem [shape: f32[32], index: 0, kind: input, shape index: {}]
  %s1 = inlined_call_operand.vmem [shape: f32[4,32], index: 1, kind: output, shape index: {}]
  // Predicated region
  $region2: #{tile.8} parent=0 // pred_check
    _
  $region3: #{tile.8} parent=0 // pred_check_branch
    %3 = sbr.rel (0) target = $region5
  $region4: #{tile.8} parent=0 // pred_region
    _
  $region5: #{tile.8} parent=0 // pred_fallthru
    _
  %v4 = vld [vmem:[%s0] ss:$0 sm:$0xff]
  %5 = vst [vmem:[%s1] sm:$0xf] %v4

// kernel: tile.9
$region0: #{tile.9}
  %s0 = inlined_call_operand.vmem [shape: f32[4,32], index: 0, kind: input, shape index: {}]
  %s1 = inlined_call_operand.vmem [shape: f32[1,128], index: 1, kind: output, shape index: {}]
  $region1: #{tile.9} parent=0
    #allocation0 [shape = 'u8[4096]{0}', space=vmem, size = 0x1000, scoped, tag = 'scoped mem for output reshape']
    #allocation1 [shape = 'u8[4096]{0}', space=vmem, size = 0x1000, scoped, tag = 'scoped mem for input reshape']
    %s3 = sshllo.u32 0, 4
    %v4 = vld [vmem:[%s0] sm:%s3]
    %5 = vst [vmem:[#allocation1] sm:%s3] %v4
    %v6 = vld [vmem:[#allocation1] sm:$0x1]
    %vm7 = vcmask 261120
    %8 = vst.msk [vmem:[#allocation0] sm:$0x1] %vm7, %v6
    %s9 = scalar_lea.vmem [#allocation1], 3
    %v10 = vld [vmem:[%s9] sm:$0x1]
    %11 = vrot.lane.b32.xlu0 %v10, 96
    %v12 = vpop.permute.xlu0 %11
    %vm13 = vcmask 1048320
    %14 = vst.msk [vmem:[#allocation0] sm:$0x1] %vm13, %v12
    %s15 = scalar_lea.vmem [#allocation1], 2
    %v16 = vld [vmem:[%s15] sm:$0x1]
    %17 = vrot.lane.b32.xlu0 %v16, 64
    %v18 = vpop.permute.xlu0 %17
    %vm19 = vcmask 785920
    %20 = vst.msk [vmem:[#allocation0] sm:$0x1] %vm19, %v18
    %s21 = scalar_lea.vmem [#allocation1], 1
    %v22 = vld [vmem:[%s21] sm:$0x1]
    %23 = vrot.lane.b32.xlu0 %v22, 32
    %v24 = vpop.permute.xlu0 %23
    %vm25 = vcmask 523520
    %26 = vst.msk [vmem:[#allocation0] sm:$0x1] %vm25, %v24
    %s28 = sshllo.u32 0, 1
    %v30 = vld [vmem:[#allocation0] sm:%s28]
    %s31 = sshllo.u32 0, 1
    %32 = vst [vmem:[%s1] sm:%s31] %v30

// kernel: _build_rope_cache.1
$region0: #{_build_rope_cache.1}
  #allocation0 [shape = 'u32[]', space=smem, size = 0x4, offset = 0x4, fixed_abs, tag = 'smem constant byte address 0x4 - core index']
  #allocation1 [shape = 'u32[144,128]{1,0:T(1,128)}', space=vmem, size = 0x12000, scoped, tag = 'internal scratch']
  %s0 = inlined_call_operand.vmem [shape: f32[2,128], index: 0, kind: input, shape index: {}]
  %s1 = inlined_call_operand.vmem [shape: f32[8,128], index: 1, kind: output, shape index: {0}]
  %s2 = inlined_call_operand.vmem [shape: f32[8,128], index: 2, kind: output, shape index: {1}]
  %3 = xla_tuple %s1, %s2
  %s4 = sld [smem:[#allocation0]]
  $region22: #{_build_rope_cache.1} parent=0
    _
  %s6 = ssub.s32 1, %s4
  %s7 = scalar_select 0, %s6, %s4
  // Predicated region
  $region2: #{_build_rope_cache.1} parent=0 // pred_check
    _
  $region3: #{_build_rope_cache.1} parent=0 // pred_check_branch
    %9 = sbr.rel (0) target = $region5
  $region4: #{_build_rope_cache.1} parent=0 // pred_region
    _
  $region5: #{_build_rope_cache.1} parent=0 // pred_fallthru
    _
  %v10 = vlaneseq
  %v11 = vshrl.u32 %v10, 7
  %s12 = smul.u32 0, 8
  %v13 = vstv %s12
  %v14 = vadd.s32 %v13, %v11
  %v15 = vmul.u32 %v14, 4
  %v16 = vcvt.s32.f32 %v15
  %v17 = vld [vmem:[%s0] sm:$0x1]
  %v18 = vlaneseq
  %v19 = vshrl.u32 %v18, 7
  %v20 = vsub.s32 0, %v19
  %v21 = vrot.slane %v17, %v20
  %v22 = vadd.f32 %v16, %v21
  %v23 = vld [vmem:[%s0 + $0x1] sm:$0x1]
  %v24 = vlaneseq
  %v25 = vshrl.u32 %v24, 7
  %v26 = vsub.s32 0, %v25
  %v27 = vrot.slane %v23, %v26
  %v28 = vmul.f32 %v22, %v27
  %v29 = vand.u32 2147483647, %v28
  %vm30 = vcmp.le.f32.partialorder %v29, 0.7853982
  %vm31 = vcmp.lt.s32.totalorder %v28, 0
  %v32 = vand.u32 %v28, 2139095040
  %v33 = vshrl.u32 %v32, 23
  %v34 = vsub.s32 %v33, 127
  %v35 = vand.u32 2147483647, %v28
  %v36 = vand.u32 %v35, 8388607
  %v37 = vor.u32 %v36, 8388608
  %v38 = vsub.s32 0, %v37
  %v39 = vadd.s32 %v34, 1
  %vm40 = vcmp.gt.s32.totalorder %v39, 0
  %v41 = vsel %vm40, %v39, 0
  %v42 = vshrl.u32 %v41, 5
  %v43 = vand.u32 %v41, 31
  %v44 = vsub.s32 32, %v43
  %v45 = vshrl.u32 683565275, %v44
  %v46 = vshll.u32 683565275, %v43
  %v47 = vshrl.u32 2475754826, %v44
  %v48 = vor.u32 %v46, %v47
  %v49 = vshll.u32 2475754826, %v43
  %v50 = vshrl.u32 2131351028, %v44
  %v51 = vor.u32 %v49, %v50
  %v52 = vshll.u32 2131351028, %v43
  %v53 = vshrl.u32 2102212464, %v44
  %v54 = vor.u32 %v52, %v53
  %v55 = vshll.u32 2102212464, %v43
  %v56 = vshrl.u32 920167782, %v44
  %v57 = vor.u32 %v55, %v56
  %v58 = vshll.u32 920167782, %v43
  %v59 = vshrl.u32 1326507024, %v44
  %v60 = vor.u32 %v58, %v59
  %vm61 = vcmp.lt.s32.totalorder %v42, 1
  %vm62 = vcmp.lt.s32.totalorder %v42, 2
  %vm63 = vcmp.lt.s32.totalorder %v42, 3
  %vm64 = vcmp.lt.s32.totalorder %v42, 4
  %v65 = vsel %vm61, %v45, %v48
  %v66 = vsel %vm64, %v54, 2102212464
  %v67 = vsel %vm63, %v51, %v66
  %v68 = vsel %vm62, %v65, %v67
  %v69 = vsel %vm61, %v48, %v51
  %v70 = vsel %vm64, %v57, 920167782
  %v71 = vsel %vm63, %v54, %v70
  %v72 = vsel %vm62, %v69, %v71
  %v73 = vsel %vm61, %v51, %v54
  %v74 = vsel %vm64, %v60, 1326507024
  %v75 = vsel %vm63, %v57, %v74
  %v76 = vsel %vm62, %v73, %v75
  %v77 = vshll.u32 %v37, 8
  %v78 = vmul.u32.u64.compose %v77, %v76
  %v79 = vextract.low.u32 %v78
  %v80 = vextract.high.u32 %v78
  %v81 = vmul.u32.u64.compose %v77, %v72
  %v82 = vextract.low.u32 %v81
  %v83 = vextract.high.u32 %v81
  %v84 = vmul.u32 %v77, %v68
  %v85 = vadd.s32 %v80, %v82
  %vm86 = vc.u32 %v80, %v82
  %v87 = vadd.s32 %v83, 1
  %v88 = vsel %vm86, %v87, %v83
  %v89 = vadd.s32 %v84, %v88
  %v90 = vadd.s32 %v89, 536870912
  %v91 = vshrl.u32 %v90, 30
  %v92 = vshll.u32 %v91, 30
  %v93 = vsub.s32 %v89, %v92
  %vm94 = vcmp.lt.s32.totalorder %v93, 0
  %v95 = vsub.s32 0, %v93
  %v96 = vsel %vm94, %v95, %v93
  %v97 = vclz %v96
  %v98 = vsub.s32 %v97, 2
  %vm99 = vcmp.gt.s32.totalorder 0, %v98
  %v100 = vsel %vm99, 0, %v98
  %v101 = vsub.s32 32, %v100
  %v102 = vshll.u32 %v93, %v100
  %v103 = vshrl.u32 %v85, %v101
  %v104 = vor.u32 %v102, %v103
  %v105 = vsub.s32 4294967266, %v100
  %v106 = vadd.s32 %v105, 127
  %v107 = vshll.u32 %v106, 23
  %v108 = vor.u32 4788187, %v107
  %v109 = vand.u32 2147483647, %v108
  %v111 = vcvt.s32.f32 %v104
  %v112 = vmul.f32 %v111, %v109
  %v113 = vxor.u32 %v112, 2147483648
  %v114 = vsel %vm31, %v113, %v112
  %v115 = vsub.s32 4, %v91
  %v116 = vsel %vm31, %v115, %v91
  %v117 = vsel %vm30, %v28, %v114
  %v118 = vsel %vm30, 0, %v116
  %v119 = vcosq.f32.pop %v117
  %v120 = vsinq.f32.pop %v117
  %vm121 = vweird.f32 %v28
  %v122 = vand.u32 %v118, 3
  %vm123 = vcmp.lt.s32.totalorder %v122, 2
  %vm124 = vcmp.eq.s32.totalorder %v122, 0
  %v125 = vxor.u32 %v120, 2147483648
  %v126 = vsel %vm124, %v119, %v125
  %vm127 = vcmp.eq.s32.totalorder %v122, 2
  %v128 = vxor.u32 %v119, 2147483648
  %v129 = vsel %vm127, %v128, %v120
  %v130 = vsel %vm123, %v126, %v129
  %v131 = vsel %vm121, nan, %v130
  %132 = vst [vmem:[%s1] sm:$0xff] %v131
  %v133 = vand.u32 2147483647, %v28
  %vm134 = vcmp.le.f32.partialorder %v133, 0.7853982
  %vm135 = vcmp.lt.s32.totalorder %v28, 0
  %v136 = vand.u32 %v28, 2139095040
  %v137 = vshrl.u32 %v136, 23
  %v138 = vsub.s32 %v137, 127
  %v139 = vand.u32 2147483647, %v28
  %v140 = vand.u32 %v139, 8388607
  %v141 = vor.u32 %v140, 8388608
  %v142 = vsub.s32 0, %v141
  %v143 = vadd.s32 %v138, 1
  %vm144 = vcmp.gt.s32.totalorder %v143, 0
  %v145 = vsel %vm144, %v143, 0
  %v146 = vshrl.u32 %v145, 5
  %v147 = vand.u32 %v145, 31
  %v148 = vsub.s32 32, %v147
  %v149 = vshrl.u32 683565275, %v148
  %v150 = vshll.u32 683565275, %v147
  %v151 = vshrl.u32 2475754826, %v148
  %v152 = vor.u32 %v150, %v151
  %v153 = vshll.u32 2475754826, %v147
  %v154 = vshrl.u32 2131351028, %v148
  %v155 = vor.u32 %v153, %v154
  %v156 = vshll.u32 2131351028, %v147
  %v157 = vshrl.u32 2102212464, %v148
  %v158 = vor.u32 %v156, %v157
  %v159 = vshll.u32 2102212464, %v147
  %v160 = vshrl.u32 920167782, %v148
  %v161 = vor.u32 %v159, %v160
  %v162 = vshll.u32 920167782, %v147
  %v163 = vshrl.u32 1326507024, %v148
  %v164 = vor.u32 %v162, %v163
  %vm165 = vcmp.lt.s32.totalorder %v146, 1
  %vm166 = vcmp.lt.s32.totalorder %v146, 2
  %vm167 = vcmp.lt.s32.totalorder %v146, 3
  %vm168 = vcmp.lt.s32.totalorder %v146, 4
  %v169 = vsel %vm165, %v149, %v152
  %v170 = vsel %vm168, %v158, 2102212464
  %v171 = vsel %vm167, %v155, %v170
  %v172 = vsel %vm166, %v169, %v171
  %v173 = vsel %vm165, %v152, %v155
  %v174 = vsel %vm168, %v161, 920167782
  %v175 = vsel %vm167, %v158, %v174
  %v176 = vsel %vm166, %v173, %v175
  %v177 = vsel %vm165, %v155, %v158
  %v178 = vsel %vm168, %v164, 1326507024
  %v179 = vsel %vm167, %v161, %v178
  %v180 = vsel %vm166, %v177, %v179
  %v181 = vshll.u32 %v141, 8
  %v182 = vmul.u32.u64.compose %v181, %v180
  %v183 = vextract.low.u32 %v182
  %v184 = vextract.high.u32 %v182
  %v185 = vmul.u32.u64.compose %v181, %v176
  %v186 = vextract.low.u32 %v185
  %v187 = vextract.high.u32 %v185
  %v188 = vmul.u32 %v181, %v172
  %v189 = vadd.s32 %v184, %v186
  %vm190 = vc.u32 %v184, %v186
  %v191 = vadd.s32 %v187, 1
  %v192 = vsel %vm190, %v191, %v187
  %v193 = vadd.s32 %v188, %v192
  %v194 = vadd.s32 %v193, 536870912
  %v195 = vshrl.u32 %v194, 30
  %v196 = vshll.u32 %v195, 30
  %v197 = vsub.s32 %v193, %v196
  %vm198 = vcmp.lt.s32.totalorder %v197, 0
  %v199 = vsub.s32 0, %v197
  %v200 = vsel %vm198, %v199, %v197
  %v201 = vclz %v200
  %v202 = vsub.s32 %v201, 2
  %vm203 = vcmp.gt.s32.totalorder 0, %v202
  %v204 = vsel %vm203, 0, %v202
  %v205 = vsub.s32 32, %v204
  %v206 = vshll.u32 %v197, %v204
  %v207 = vshrl.u32 %v189, %v205
  %v208 = vor.u32 %v206, %v207
  %v209 = vsub.s32 4294967266, %v204
  %v210 = vadd.s32 %v209, 127
  %v211 = vshll.u32 %v210, 23
  %v212 = vor.u32 4788187, %v211
  %v213 = vand.u32 2147483647, %v212
  %v215 = vcvt.s32.f32 %v208
  %v216 = vmul.f32 %v215, %v213
  %v217 = vxor.u32 %v216, 2147483648
  %v218 = vsel %vm135, %v217, %v216
  %v219 = vsub.s32 4, %v195
  %v220 = vsel %vm135, %v219, %v195
  %v221 = vsel %vm134, %v28, %v218
  %v222 = vsel %vm134, 0, %v220
  %v223 = vcosq.f32.pop %v221
  %v224 = vsinq.f32.pop %v221
  %vm225 = vweird.f32 %v28
  %v226 = vadd.s32 %v222, 3
  %v227 = vand.u32 %v226, 3
  %vm228 = vcmp.lt.s32.totalorder %v227, 2
  %vm229 = vcmp.eq.s32.totalorder %v227, 0
  %v230 = vxor.u32 %v224, 2147483648
  %v231 = vsel %vm229, %v223, %v230
  %vm232 = vcmp.eq.s32.totalorder %v227, 2
  %v233 = vxor.u32 %v223, 2147483648
  %v234 = vsel %vm232, %v233, %v224
  %v235 = vsel %vm228, %v231, %v234
  %v236 = vsel %vm225, nan, %v235
  %237 = vst [vmem:[%s2] sm:$0xff] %v236
  // Predicated region
  $region6: #{_build_rope_cache.1} parent=0 // pred_check
    _
  $region7: #{_build_rope_cache.1} parent=0 // pred_check_branch
    %239 = sbr.rel (0) target = $region9
  $region8: #{_build_rope_cache.1} parent=0 // pred_region
    _
  $region9: #{_build_rope_cache.1} parent=0 // pred_fallthru
    _
  // Predicated region
  $region10: #{_build_rope_cache.1} parent=0 // pred_check
    _
  $region11: #{_build_rope_cache.1} parent=0 // pred_check_branch
    %241 = sbr.rel (0) target = $region13
  $region12: #{_build_rope_cache.1} parent=0 // pred_region
    _
  $region13: #{_build_rope_cache.1} parent=0 // pred_fallthru
    _
  // Predicated region
  $region14: #{_build_rope_cache.1} parent=0 // pred_check
    _
  $region15: #{_build_rope_cache.1} parent=0 // pred_check_branch
    %243 = sbr.rel (0) target = $region17
  $region16: #{_build_rope_cache.1} parent=0 // pred_region
    _
  $region17: #{_build_rope_cache.1} parent=0 // pred_fallthru
    _
  // Predicated region
  $region18: #{_build_rope_cache.1} parent=0 // pred_check
    _
  $region19: #{_build_rope_cache.1} parent=0 // pred_check_branch
    %245 = sbr.rel (0) target = $region21
  $region20: #{_build_rope_cache.1} parent=0 // pred_region
    _
  $region21: #{_build_rope_cache.1} parent=0 // pred_fallthru
    _

</llo_original>
